<compile_context>
chip_gen: v7x
topology: tpu7x:2x2x1
jax: 0.10.0
libtpu: 0.0.40
codegen_flags: <defaults>
</compile_context>

<pallas_src>
from functools import partial

import jax
import jax.numpy as jnp
from jax import lax
from jax.experimental import pallas as pl
from jax.experimental.pallas import tpu as pltpu


# ----------------------------- helpers -------------------------------------- #

def _cdiv(a, b):
    return -(-a // b)


def _round_up(a, b):
    return _cdiv(a, b) * b


def _target_to_indices(target):
    """'peaks' one-hot (N,C) or integer (N,) targets -> (N,1) int32 indices."""
    target = jnp.asarray(target)
    if target.ndim == 2:
        idx = jnp.argmax(target, axis=-1).astype(jnp.int32)
    else:
        idx = target.astype(jnp.int32)
    return idx.reshape(-1, 1)


# ----------------------------- kernels -------------------------------------- #

def _nll_partial_kernel(out_ref, idx_ref, loss_ref, *, inv_n):
    """Tiled over N: accumulate sum of picked log-probs; finalize to -mean."""
    step = pl.program_id(0)

    @pl.when(step == 0)
    def _init():
        loss_ref[...] = jnp.zeros_like(loss_ref)

    out = out_ref[...].astype(jnp.float32)                    # (tn, C) on vregs
    tn, c = out.shape
    classes = lax.broadcasted_iota(jnp.int32, (tn, c), 1)     # (tn, C)
    mask = (classes == idx_ref[...]).astype(jnp.float32)      # in-kernel one-hot
    loss_ref[...] += jnp.sum(out * mask)                      # padded rows add 0

    @pl.when(step == pl.num_programs(0) - 1)
    def _finalize():
        loss_ref[...] = loss_ref[...] * (-inv_n)


def _vx_partial_kernel(vg_ref, vx_ref, part_ref, acc_ref):
    """Streamed lane-dense dot: per-core partial of sum(v_bar * params)."""
    j = pl.program_id(1)

    @pl.when(j == 0)
    def _init():
        acc_ref[...] = jnp.zeros_like(acc_ref)
        part_ref[...] = jnp.zeros_like(part_ref)

    prod = vg_ref[...].astype(jnp.float32) * vx_ref[...].astype(jnp.float32)
    # Sublane reduce only per step; full cross-lane reduce deferred to finalize.
    acc_ref[...] += jnp.sum(prod, axis=0, keepdims=True)      # (1, lane_width)

    @pl.when(j == pl.num_programs(1) - 1)
    def _finalize():
        part_ref[0, 0] = jnp.sum(acc_ref[...])


# ----------------------------- wrappers ------------------------------------- #

def _nll_pallas(output, idx, *, max_tile_n=1024):
    """-mean picked log-prob, tiled over N with a resident (1,1) accumulator."""
    n, c = output.shape
    tn = min(max_tile_n, _round_up(n, 8))
    padded_n = _round_up(n, tn)
    if padded_n != n:
        output = jnp.pad(output, ((0, padded_n - n), (0, 0)))   # padded rows = 0
        idx = jnp.pad(idx, ((0, padded_n - n), (0, 0)))          # -> contribute 0
    steps = padded_n // tn

    loss = pl.pallas_call(
        partial(_nll_partial_kernel, inv_n=1.0 / n),
        out_shape=jax.ShapeDtypeStruct((1, 1), jnp.float32),
        grid=(steps,),
        in_specs=[
            pl.BlockSpec((tn, c), lambda i: (i, 0)),             # output tile
            pl.BlockSpec((tn, 1), lambda i: (i, 0)),             # idx tile
        ],
        out_specs=pl.BlockSpec((1, 1), lambda i: (0, 0)),        # resident acc
        compiler_params=pltpu.CompilerParams(
            dimension_semantics=("arbitrary",)),
        cost_estimate=pl.CostEstimate(
            flops=int(2 * padded_n * c),
            transcendentals=0,
            bytes_accessed=int(output.size * output.dtype.itemsize
                               + idx.size * 4 + 4)),
    )(output, idx)
    return loss[0, 0]


def _vx_dot_pallas(vg_flat, vx_flat, *, lane_width=512, num_splits=2,
                   tile_budget_bytes=2 << 20):
    """sum(vg_flat * vx_flat) as a lane-dense streamed reduce."""
    total = vg_flat.shape[0]
    itemsize = max(vg_flat.dtype.itemsize, vx_flat.dtype.itemsize)

    # Plan: rows per core split (multiple of tile), tile rows from VMEM budget.
    rows_needed = _cdiv(max(total, 1), lane_width)
    rows_per_split = _round_up(_cdiv(rows_needed, num_splits), 8)
    tile_cap = max(8, (tile_budget_bytes // (lane_width * itemsize)) // 8 * 8)
    tile_rows = min(tile_cap, rows_per_split)
    rows_per_split = _round_up(rows_per_split, tile_rows)
    total_rows = rows_per_split * num_splits
    steps = rows_per_split // tile_rows

    pad_elems = total_rows * lane_width - total
    vg = jnp.pad(vg_flat, (0, pad_elems)).reshape(total_rows, lane_width)
    vx = jnp.pad(vx_flat, (0, pad_elems)).reshape(total_rows, lane_width)

    partials = pl.pallas_call(
        _vx_partial_kernel,
        out_shape=jax.ShapeDtypeStruct((8 * num_splits, 128), jnp.float32),
        grid=(num_splits, steps),
        in_specs=[
            pl.BlockSpec((tile_rows, lane_width),
                         lambda i, j: (i * steps + j, 0)),
            pl.BlockSpec((tile_rows, lane_width),
                         lambda i, j: (i * steps + j, 0)),
        ],
        out_specs=pl.BlockSpec((8, 128), lambda i, j: (i, 0)),   # per-core block
        scratch_shapes=[pltpu.VMEM((1, lane_width), jnp.float32)],
        compiler_params=pltpu.CompilerParams(
            dimension_semantics=("parallel", "arbitrary")),
        cost_estimate=pl.CostEstimate(
            flops=int(2 * total_rows * lane_width),
            transcendentals=0,
            bytes_accessed=int(vg.size * vg.dtype.itemsize
                               + vx.size * vx.dtype.itemsize
                               + 8 * num_splits * 128 * 4)),
    )(vg, vx)
    # Only [0,0] of each per-core (8,128) block is nonzero -> summing is exact.
    return jnp.sum(partials)


def custom_nll(output, target, wgrads=None, weights=None, bgrads=None, biases=None,
               *, vx_term=True, lane_width=512, num_splits=2,
               max_tile_n=1024, tile_budget_bytes=2 << 20):
    """Pallas implementation of CustomNLL.forward.

    output : (N, C) log-probabilities (any float dtype; cast on vregs)
    target : (N, C) one-hot ('peaks') or (N,) integer class indices
    wgrads/weights : (L, H, H) stacked v_bar weight grads / fc weights
    bgrads/biases  : (L, H)    stacked v_bar bias grads   / fc biases
    """
    output = jnp.asarray(output)
    idx = _target_to_indices(target)
    nll = _nll_pallas(output, idx, max_tile_n=max_tile_n)
    if not vx_term:
        return nll

    wgrads = jnp.asarray(wgrads)
    weights = jnp.asarray(weights)
    bgrads = jnp.asarray(bgrads)
    biases = jnp.asarray(biases)

    # Order-independent reduction: any flattening / concatenation is exact as
    # long as both streams use the identical layout + padding.
    vg = jnp.concatenate([wgrads.reshape(-1), bgrads.reshape(-1)])
    vx = jnp.concatenate([weights.reshape(-1), biases.reshape(-1)])
    vtx = _vx_dot_pallas(vg, vx, lane_width=lane_width, num_splits=num_splits,
                         tile_budget_bytes=tile_budget_bytes)
    return nll - vtx


# ----------------------------- reference ------------------------------------ #

def _reference(output, target_onehot, wgrads, weights, bgrads, biases, vx_term=True):
    tgt_idx = jnp.argmax(target_onehot, axis=-1)
    nll = -jnp.mean(output[jnp.arange(output.shape[0]), tgt_idx])
    if not vx_term:
        return nll
    vtx = jnp.sum(wgrads * weights) + jnp.sum(bgrads * biases)
    return nll - vtx


# ----------------------------- demo / test ----------------------------------- #

if __name__ == "__main__":
    key = jax.random.PRNGKey(0)
    N, C = 16, 4           # batch, num classes
    L, H = 2, 32           # num_layers, hidden width of each fc layer

    k1, k2, k3, k4, k5, k6 = jax.random.split(key, 6)

    # log-probabilities (what nll_loss expects)
    logits = jax.random.normal(k1, (N, C), dtype=jnp.float32)
    output = jax.nn.log_softmax(logits, axis=-1)

    # 'peaks'-style one-hot targets
    tgt_idx = jax.random.randint(k2, (N,), 0, C)
    target_onehot = jax.nn.one_hot(tgt_idx, C, dtype=jnp.float32)

    # Deterministic synthetic fc parameters and v_bar gradients (stacked over layers).
    weights = 0.1 * jax.random.normal(k3, (L, H, H), dtype=jnp.float32)
    biases = 0.1 * jax.random.normal(k4, (L, H), dtype=jnp.float32)
    wgrads = 0.05 * jax.random.normal(k5, (L, H, H), dtype=jnp.float32)
    bgrads = 0.05 * jax.random.normal(k6, (L, H), dtype=jnp.float32)

    # Small lane_width / tile budget / NLL tile force multi-step grids and both
    # core-split partials at this toy size; omit these kwargs for real shapes.
    loss = custom_nll(output, target_onehot, wgrads, weights, bgrads, biases,
                      vx_term=True, lane_width=128, tile_budget_bytes=4096,
                      max_tile_n=8)
    loss = jax.block_until_ready(loss)

    ref = _reference(output, target_onehot, wgrads, weights, bgrads, biases,
                     vx_term=True)
    assert jnp.allclose(loss, ref, rtol=1e-5, atol=1e-5), (loss, ref)

    # Default (production) tiling path as well.
    loss_big = jax.block_until_ready(
        custom_nll(output, target_onehot, wgrads, weights, bgrads, biases,
                   vx_term=True))
    assert jnp.allclose(loss_big, ref, rtol=1e-5, atol=1e-5), (loss_big, ref)

    # vx_term=False (plain NLL) path, tiled, and integer targets.
    loss_nll = jax.block_until_ready(
        custom_nll(output, target_onehot, vx_term=False, max_tile_n=8))
    ref_nll = _reference(output, target_onehot, None, None, None, None,
                         vx_term=False)
    assert jnp.allclose(loss_nll, ref_nll, rtol=1e-5, atol=1e-5), (loss_nll, ref_nll)

    loss_idx = jax.block_until_ready(custom_nll(output, tgt_idx, vx_term=False))
    assert jnp.allclose(loss_idx, ref_nll, rtol=1e-5, atol=1e-5), (loss_idx, ref_nll)

    print("KERNEL_OK")
</pallas_src>

<mosaic_0001>
module attributes {stable_mosaic.version = 11 : i64} {
  func.func @_nll_partial_kernel(%arg0: i32, %arg1: memref<8x4xf32, #tpu.memory_space<vmem>>, %arg2: memref<8x1xi32, #tpu.memory_space<vmem>>, %arg3: memref<1x1xf32, #tpu.memory_space<vmem>>) attributes {dimension_semantics = [#tpu.dimension_semantics<arbitrary>], iteration_bounds = array<i64: 2>, scalar_prefetch = 0 : i64, scratch_operands = 0 : i64, tpu.core_type = #tpu.core_type<tc>, window_params = [{transform_indices = @transform_0, window_bounds = array<i64: 8, 4>}, {transform_indices = @transform_1, window_bounds = array<i64: 8, 1>}, {pipeline_mode = #tpu.pipeline_mode<synchronous>, transform_indices = @transform_2, window_bounds = array<i64: 1, 1>}]} {
    %c0_i32 = arith.constant 0 : i32
    %0 = arith.cmpi eq, %arg0, %c0_i32 : i32
    %1 = arith.extui %0 : i1 to i32
    %c0_i32_0 = arith.constant 0 : i32
    %2 = arith.cmpi ne, %1, %c0_i32_0 : i32
    scf.if %2 {
      %cst_9 = arith.constant 0.000000e+00 : f32
      %22 = vector.broadcast %cst_9 : f32 to vector<1x1xf32>
      %c0_10 = arith.constant 0 : index
      %c0_11 = arith.constant 0 : index
      %23 = vector.load %arg3[%c0_10, %c0_11] : memref<1x1xf32, #tpu.memory_space<vmem>>, vector<1x1xf32>
      tpu.vector_store %arg3[%c0_10, %c0_11], %22 {strides = array<i32>} : memref<1x1xf32, #tpu.memory_space<vmem>>, vector<1x1xf32>,
    } else {
    }
    %c0 = arith.constant 0 : index
    %c0_1 = arith.constant 0 : index
    %3 = vector.load %arg1[%c0, %c0_1] : memref<8x4xf32, #tpu.memory_space<vmem>>, vector<8x4xf32>
    %4 = tpu.iota {dimensions = array<i32: 1>} : vector<8x4xi32>
    %c0_2 = arith.constant 0 : index
    %c0_3 = arith.constant 0 : index
    %5 = vector.load %arg2[%c0_2, %c0_3] : memref<8x1xi32, #tpu.memory_space<vmem>>, vector<8x1xi32>
    %6 = vector.broadcast %5 : vector<8x1xi32> to vector<8x4xi32>
    %7 = arith.cmpi eq, %4, %6 : vector<8x4xi32>
    %8 = arith.extui %7 : vector<8x4xi1> to vector<8x4xi32>
    %9 = arith.sitofp %8 : vector<8x4xi32> to vector<8x4xf32>
    %c0_4 = arith.constant 0 : index
    %c0_5 = arith.constant 0 : index
    %10 = vector.load %arg3[%c0_4, %c0_5] : memref<1x1xf32, #tpu.memory_space<vmem>>, vector<1x1xf32>
    %11 = arith.mulf %3, %9 : vector<8x4xf32>
    %12 = vector.shape_cast %11 : vector<8x4xf32> to vector<1x8x4xf32>
    %cst = arith.constant dense<0.000000e+00> : vector<1xf32>
    %13 = vector.multi_reduction <add>, %12, %cst [1, 2] : vector<1x8x4xf32> to vector<1xf32>
    %14 = vector.shape_cast %13 : vector<1xf32> to vector<1x1x1xf32>
    %15 = vector.extract %14[0, 0, 0] : f32 from vector<1x1x1xf32>
    %16 = vector.broadcast %15 : f32 to vector<1x1xf32>
    %17 = arith.addf %10, %16 : vector<1x1xf32>
    %c0_6 = arith.constant 0 : index
    %c0_7 = arith.constant 0 : index
    %18 = vector.load %arg3[%c0_6, %c0_7] : memref<1x1xf32, #tpu.memory_space<vmem>>, vector<1x1xf32>
    tpu.vector_store %arg3[%c0_6, %c0_7], %17 {strides = array<i32>} : memref<1x1xf32, #tpu.memory_space<vmem>>, vector<1x1xf32>,
    %c1_i32 = arith.constant 1 : i32
    %19 = arith.cmpi eq, %arg0, %c1_i32 : i32
    %20 = arith.extui %19 : i1 to i32
    %c0_i32_8 = arith.constant 0 : i32
    %21 = arith.cmpi ne, %20, %c0_i32_8 : i32
    scf.if %21 {
      %c0_9 = arith.constant 0 : index
      %c0_10 = arith.constant 0 : index
      %22 = vector.load %arg3[%c0_9, %c0_10] : memref<1x1xf32, #tpu.memory_space<vmem>>, vector<1x1xf32>
      %cst_11 = arith.constant -6.250000e-02 : f32
      %23 = vector.broadcast %cst_11 : f32 to vector<1x1xf32>
      %24 = arith.mulf %22, %23 : vector<1x1xf32>
      %c0_12 = arith.constant 0 : index
      %c0_13 = arith.constant 0 : index
      %25 = vector.load %arg3[%c0_12, %c0_13] : memref<1x1xf32, #tpu.memory_space<vmem>>, vector<1x1xf32>
      tpu.vector_store %arg3[%c0_12, %c0_13], %24 {strides = array<i32>} : memref<1x1xf32, #tpu.memory_space<vmem>>, vector<1x1xf32>,
    } else {
    }
    return
  }
  func.func @transform_0(%arg0: i32) -> (i32, i32) {
    %c0_i32 = arith.constant 0 : i32
    %c0_i32_0 = arith.constant 0 : i32
    return %arg0, %c0_i32 : i32, i32
  }
  func.func @transform_1(%arg0: i32) -> (i32, i32) {
    %c0_i32 = arith.constant 0 : i32
    %c0_i32_0 = arith.constant 0 : i32
    return %arg0, %c0_i32 : i32, i32
  }
  func.func @transform_2(%arg0: i32) -> (i32, i32) {
    %c0_i32 = arith.constant 0 : i32
    %c0_i32_0 = arith.constant 0 : i32
    %c0_i32_1 = arith.constant 0 : i32
    return %c0_i32, %c0_i32_0 : i32, i32
  }
}

</mosaic_0001>

<llo_original>
// kernel: tpu_custom_call.1
$region0: #{tpu_custom_call.1}
  #allocation0 [shape = 'u32[]', space=smem, size = 0x4, offset = 0x4, fixed_abs, tag = 'smem constant byte address 0x4 - core index']
  #allocation1 [shape = 'u32[144,128]{1,0:T(1,128)}', space=vmem, size = 0x12000, scoped, tag = 'internal scratch']
  %s0 = inlined_call_operand.vmem [shape: f32[16,4], index: 0, kind: input, shape index: {}]
  %s1 = inlined_call_operand.vmem [shape: s32[16,1], index: 1, kind: input, shape index: {}]
  %s2 = inlined_call_operand.hbm [shape: f32[1,1], index: 2, kind: output, shape index: {}]
  %s3 = sld [smem:[#allocation0]]
  $region49: #{tpu_custom_call.1} parent=0
    _
  %s5 = ssub.s32 1, %s3
  %s6 = scalar_select 0, %s5, %s3
  $region1: #{tpu_custom_call.1} parent=0
    #allocation2 [shape = 'u8[512]{0}', space=vmem, size = 0x400, scoped, tag = 'output window, operand 0, single buffered']
    #allocation3 [shape = 's32[2]{0}', space=sflag, size = 0x8, scoped, tag = 'scoped memory for tpu_custom_call.1']
    %7 = vsyncpa [#allocation3], 0
    loop: start=0, step=1, limit=4
    $region2: #{tpu_custom_call.1} parent=1 // loop_pre_header
      _
    $region3: #{tpu_custom_call.1} parent=1 // loop_header
      %s9 = sphi 0, %s13
      %p10 = scmp.ge.s32.totalorder %s9, 4
      %s19 = sphi 0, %s21
      %s22 = sphi 0, %s19
      %s23 = sphi 0, %s22
      %s39 = sphi 0, %s23
      %s45 = sphi 0, %s47
      %s48 = sphi 0, %s45
      %s49 = sphi 0, %s48
      %s65 = sphi 0, %s49
      %s69 = sphi 0, %s69
      %s71 = sphi 0, %s69
      %s72 = sphi 0, %s71
      %s86 = sphi 0, %s72
    $region4: #{tpu_custom_call.1} parent=1 // loop_header_branch
      %12 = sbr.rel (%p10) target = $region8
    $region5: #{tpu_custom_call.1} parent=1 // loop_body
      %s14 = ssub.s32 %s9, 1
      %s15 = ssub.s32 %s9, 2
      %s16 = sadd.s32 %s9, 1
      %s17 = ssub.s32 %s9, %s16
      %p18 = scmp.eq.s32.totalorder %s17, 0
      %s20 = sadd.s32 %s19, 1
      %s21 = scalar_select %p18, %s19, %s20
      %p24 = pneg %p18
      %p25 = scmp.eq.s32.totalorder %s9, 1
      %p26 = por %p24, %p25
      %p27 = scmp.ne.s32.totalorder %s19, %s22
      %p28 = scmp.eq.s32.totalorder %s9, 0
      %p29 = por %p27, %p28
      %p30 = scmp.ne.s32.totalorder %s19, %s22
      %p31 = scmp.eq.s32.totalorder %s14, 1
      %p32 = por %p30, %p31
      %p33 = scmp.ne.s32.totalorder %s22, %s23
      %p34 = scmp.eq.s32.totalorder %s14, 0
      %p35 = por %p33, %p34
      %p36 = scmp.ne.s32.totalorder %s22, %s23
      %p37 = scmp.eq.s32.totalorder %s15, 1
      %p38 = por %p36, %p37
      %p40 = scmp.ne.s32.totalorder %s23, %s39
      %p41 = scmp.eq.s32.totalorder %s15, 0
      %p42 = por %p40, %p41
      %s43 = ssub.s32 %s9, %s16
      %p44 = scmp.eq.s32.totalorder %s43, 0
      %s46 = sadd.s32 %s45, 1
      %s47 = scalar_select %p44, %s45, %s46
      %p50 = pneg %p44
      %p51 = scmp.eq.s32.totalorder %s9, 1
      %p52 = por %p50, %p51
      %p53 = scmp.ne.s32.totalorder %s45, %s48
      %p54 = scmp.eq.s32.totalorder %s9, 0
      %p55 = por %p53, %p54
      %p56 = scmp.ne.s32.totalorder %s45, %s48
      %p57 = scmp.eq.s32.totalorder %s14, 1
      %p58 = por %p56, %p57
      %p59 = scmp.ne.s32.totalorder %s48, %s49
      %p60 = scmp.eq.s32.totalorder %s14, 0
      %p61 = por %p59, %p60
      %p62 = scmp.ne.s32.totalorder %s48, %s49
      %p63 = scmp.eq.s32.totalorder %s15, 1
      %p64 = por %p62, %p63
      %p66 = scmp.ne.s32.totalorder %s49, %s65
      %p67 = scmp.eq.s32.totalorder %s15, 0
      %p68 = por %p66, %p67
      %s70 = sadd.s32 %s69, 1
      %p73 = scmp.eq.s32.totalorder %s9, 1
      %p74 = scmp.ne.s32.totalorder %s69, %s71
      %p75 = scmp.eq.s32.totalorder %s9, 0
      %p76 = por %p74, %p75
      %p77 = scmp.ne.s32.totalorder %s69, %s71
      %p78 = scmp.eq.s32.totalorder %s14, 1
      %p79 = por %p77, %p78
      %p80 = scmp.ne.s32.totalorder %s71, %s72
      %p81 = scmp.eq.s32.totalorder %s14, 0
      %p82 = por %p80, %p81
      %p83 = scmp.ne.s32.totalorder %s71, %s72
      %p84 = scmp.eq.s32.totalorder %s15, 1
      %p85 = por %p83, %p84
      %p87 = scmp.ne.s32.totalorder %s72, %s86
      %p88 = scmp.eq.s32.totalorder %s15, 0
      %p89 = por %p87, %p88
      %p90 = scmp.le.s32.totalorder 1, %s9
      %p91 = scmp.lt.s32.totalorder %s9, 3
      %p92 = pnand %p90, %p91
      %p93 = pneg %p92
      // Predicated region
      $region9: #{tpu_custom_call.1} parent=5 // pred_check
        _
      $region10: #{tpu_custom_call.1} parent=5 // pred_check_branch
        %95 = sbr.rel (%p92) target = $region12
      $region11: #{tpu_custom_call.1} parent=5 // pred_region
        %s96 = ssub.s32 %s9, 1
      $region12: #{tpu_custom_call.1} parent=5 // pred_fallthru
        _
      %p97 = scmp.lt.s32.totalorder %s9, 2
      // Predicated region
      $region13: #{tpu_custom_call.1} parent=5 // pred_check
        %p98 = pneg %p97
      $region14: #{tpu_custom_call.1} parent=5 // pred_check_branch
        %100 = sbr.rel (%p98) target = $region16
      $region15: #{tpu_custom_call.1} parent=5 // pred_region
        // Predicated region
        $region17: #{tpu_custom_call.1} parent=15 // pred_check
          %p101 = pneg %p29
        $region18: #{tpu_custom_call.1} parent=15 // pred_check_branch
          %103 = sbr.rel (%p101) target = $region20
        $region19: #{tpu_custom_call.1} parent=15 // pred_region
          %p104 = scmp.lt.s32.totalorder %s9, 1
          %s105 = scalar_select %p104, %s9, 1
          %s106 = smul.addr %s105, 8
          %s107 = scalar_lea.vmem %s0, %s106
        $region20: #{tpu_custom_call.1} parent=15 // pred_fallthru
          _
        // Predicated region
        $region21: #{tpu_custom_call.1} parent=15 // pred_check
          %p108 = pneg %p55
        $region22: #{tpu_custom_call.1} parent=15 // pred_check_branch
          %110 = sbr.rel (%p108) target = $region24
        $region23: #{tpu_custom_call.1} parent=15 // pred_region
          %p111 = scmp.lt.s32.totalorder %s9, 1
          %s112 = scalar_select %p111, %s9, 1
          %s113 = smul.addr %s112, 8
          %s114 = scalar_lea.vmem %s1, %s113
        $region24: #{tpu_custom_call.1} parent=15 // pred_fallthru
          _
      $region16: #{tpu_custom_call.1} parent=5 // pred_fallthru
        _
      %p115 = scmp.le.s32.totalorder 1, %s9
      %p116 = scmp.lt.s32.totalorder %s9, 3
      %p117 = pnand %p115, %p116
      %p118 = pneg %p117
      // Predicated region
      $region25: #{tpu_custom_call.1} parent=5 // pred_check
        _
      $region26: #{tpu_custom_call.1} parent=5 // pred_check_branch
        %120 = sbr.rel (%p117) target = $region28
      $region27: #{tpu_custom_call.1} parent=5 // pred_region
        %s121 = ssub.s32 %s9, 1
        %p122 = scmp.lt.s32.totalorder %s14, 1
        %s123 = scalar_select %p122, %s14, 1
        %s124 = smul.addr %s123, 8
        %s125 = scalar_lea.vmem %s0, %s124
        %p126 = pneg %p35
        %p127 = pneg %p32
        %p128 = scmp.lt.s32.totalorder %s14, 1
        %s129 = scalar_select %p128, %s14, 1
        %s130 = smul.addr %s129, 8
        %s131 = scalar_lea.vmem %s1, %s130
        %p132 = pneg %p61
        %p133 = pneg %p58
        %p134 = pneg %p82
        %p135 = pneg %p79
        %p136 = scmp.lt.s32.totalorder %s14, 1
        %s137 = scalar_select %p136, %s14, 1
        %s138 = smul.addr %s137, 8
        %s139 = scalar_lea.vmem %s0, %s138
        %p140 = scmp.lt.s32.totalorder %s14, 1
        %s141 = scalar_select %p140, %s14, 1
        %s142 = smul.addr %s141, 8
        %s143 = scalar_lea.vmem %s1, %s142
        %p144 = scmp.eq.s32.totalorder %s14, 0
        // Predicated region
        $region29: #{tpu_custom_call.1} parent=27 // pred_check
          %p145 = pneg %p144
        $region30: #{tpu_custom_call.1} parent=27 // pred_check_branch
          %147 = sbr.rel (%p145) target = $region32
        $region31: #{tpu_custom_call.1} parent=27 // pred_region
          %vm148 = vcmask 0
          %149 = vst.msk [vmem:[#allocation2] sm:$0x1] %vm148, 0.0
        $region32: #{tpu_custom_call.1} parent=27 // pred_fallthru
          _
        %v150 = vld [vmem:[%s139] sm:$0xff]
        %v151 = vlaneseq
        %v152 = vand.u32 %v151, 127
        %v153 = vld [vmem:[%s143] sm:$0xff]
        %154 = vset.pattern.permute.xlu0 0
        %155 = vperm.xlu0 %154, %v153
        %v156 = vpop.permute.xlu0 %155
        %vm157 = vcmp.eq.s32.totalorder %v152, %v156
        %v158 = vsel %vm157, 1, 0
        %v159 = vcvt.s32.f32 %v158
        %v160 = vld [vmem:[#allocation2] sm:$0x1]
        %v161 = vmul.f32 %v150, %v159
        %vm162 = vcmask 31744
        %v163 = vsel %vm162, %v161, 0.0
        %164 = vadd.xlane.f32.xlu0 %v163
        %v165 = vpop.xlane.xlu0 %164
        %v166 = vrot.slane %v165, 4
        %v167 = vadd.f32 %v165, %v166
        %v168 = vrot.slane %v167, 2
        %v169 = vadd.f32 %v167, %v168
        %v170 = vrot.slane %v169, 1
        %v171 = vadd.f32 %v169, %v170
        %s172 = vtos %v171
        %v173 = vstv %s172
        %v174 = vadd.f32 %v160, %v173
        %vm175 = vcmask 0
        %176 = vst.msk [vmem:[#allocation2] sm:$0x1] %vm175, %v174
        %p177 = scmp.eq.s32.totalorder %s14, 1
        // Predicated region
        $region33: #{tpu_custom_call.1} parent=27 // pred_check
          %p178 = pneg %p177
        $region34: #{tpu_custom_call.1} parent=27 // pred_check_branch
          %180 = sbr.rel (%p178) target = $region36
        $region35: #{tpu_custom_call.1} parent=27 // pred_region
          %v181 = vld [vmem:[#allocation2] sm:$0x1]
          %v182 = vmul.f32 %v181, -0.0625
          %183 = vst.msk [vmem:[#allocation2] sm:$0x1] %vm175, %v182
        $region36: #{tpu_custom_call.1} parent=27 // pred_fallthru
          _
        // Predicated region
        $region37: #{tpu_custom_call.1} parent=27 // pred_check
          %p184 = pneg %p79
        $region38: #{tpu_custom_call.1} parent=27 // pred_check_branch
          %186 = sbr.rel (%p184) target = $region40
        $region39: #{tpu_custom_call.1} parent=27 // pred_region
          %s188 = ssub.s32 16, 16
          %189 = vsyncadd [#allocation3], %s188
          %s191 = sshll.u32 [#allocation2], 4
          %s192 = int_to_ptr.vmem [resolvable:$true] %s191
          %194 = dma.vmem_to_hbm [thread:$0]  %s192, 16, %s2, [#allocation3]
        $region40: #{tpu_custom_call.1} parent=27 // pred_fallthru
          _
        // Predicated region
        $region41: #{tpu_custom_call.1} parent=27 // pred_check
          %p195 = pneg %p79
        $region42: #{tpu_custom_call.1} parent=27 // pred_check_branch
          %197 = sbr.rel (%p195) target = $region44
        $region43: #{tpu_custom_call.1} parent=27 // pred_region
          %198 = dma.done [#allocation3], 16
        $region44: #{tpu_custom_call.1} parent=27 // pred_fallthru
          _
      $region28: #{tpu_custom_call.1} parent=5 // pred_fallthru
        _
      %p199 = scmp.le.s32.totalorder 2, %s9
      // Predicated region
      $region45: #{tpu_custom_call.1} parent=5 // pred_check
        %p200 = pneg %p199
      $region46: #{tpu_custom_call.1} parent=5 // pred_check_branch
        %202 = sbr.rel (%p200) target = $region48
      $region47: #{tpu_custom_call.1} parent=5 // pred_region
        %s203 = ssub.s32 %s9, 2
      $region48: #{tpu_custom_call.1} parent=5 // pred_fallthru
        _
    $region6: #{tpu_custom_call.1} parent=1 // loop_footer
      %s13 = sadd.s32 1, %s9
    $region7: #{tpu_custom_call.1} parent=1 // loop_footer_branch
      %8 = sbr.rel target = $region3
    $region8: #{tpu_custom_call.1} parent=1 // loop_exit
      _
    %204 = vsyncpa [#allocation3], 1
    %s205 = scalar_lea.sflag [#allocation3], 1
    %206 = vsyncpa %s205, 1

</llo_original>
